<compile_context>
chip_gen: v7x
topology: tpu7x:2x2x1
jax: 0.10.0
libtpu: 0.0.40
codegen_flags: <defaults>
</compile_context>

<pallas_src>
import jax
import jax.numpy as jnp
from jax.experimental import pallas as pl
from jax.experimental.pallas import tpu as pltpu

CIN, COUT = 3, 7
KH, KW = 3, 3
STRIDE = 2

# phase p = 2*ph + pw ; each tap is (kh, kw, dh, dw) where (dh, dw) is the
# shift into the 1-padded input: out[2a+ph, 2b+pw] += w[ci,co,kh,kw]*xp[a+dh, b+dw]
_PHASE_TAPS = (
    ((0, 0, 1, 1), (0, 2, 1, 0), (2, 0, 0, 1), (2, 2, 0, 0)),  # ee
    ((0, 1, 1, 1), (2, 1, 0, 1)),                              # eo
    ((1, 0, 1, 1), (1, 2, 1, 0)),                              # oe
    ((1, 1, 1, 1),),                                           # oo
)
_SHIFTS = ((0, 0), (0, 1), (1, 0), (1, 1))


def _make_kernel(wp, pout):
    """wp: padded row stride (W+3); pout: flat phase extent (H+1)*wp."""

    def kernel(x_ref, w_ref, b2_ref, out_ref):
        # x_ref  : (1, CIN, PIN)       padded input, spatial flattened into lanes
        # w_ref  : (COUT, CIN*KH*KW)   weight columns: w_ref[:, (ci*3+kh)*3+kw]
        # b2_ref : (COUT, 1)           bias + 2.0
        # out_ref: (1, 4, COUT, POUT)  four parity phases, flat padded layout
        x = x_ref[0]                                       # (CIN, PIN)
        w = w_ref[...]                                     # (COUT, 27)
        b2 = jnp.broadcast_to(b2_ref[...], (COUT, pout))   # hoisted once

        # Each (ci, shift) slab extracted once; shared by every phase/tap.
        slabs = {}
        for ci in range(CIN):
            for dh, dw in _SHIFTS:
                s = dh * wp + dw
                slabs[(ci, dh, dw)] = x[ci:ci + 1, s:s + pout]   # (1, POUT)

        for p, taps in enumerate(_PHASE_TAPS):
            acc = b2                                        # bias+2 as accumulator init
            for kh, kw, dh, dw in taps:
                for ci in range(CIN):
                    t = (ci * KH + kh) * KW + kw
                    acc = acc + w[:, t:t + 1] * slabs[(ci, dh, dw)]   # (7,1)*(1,POUT)
            out_ref[0, p] = acc                             # dense (COUT, POUT) store

    return kernel


@jax.jit
def conv_transpose_add2(x, w, b):
    """x: (N, CIN, H, W) f32 NCHW; w: (CIN, COUT, KH, KW) ConvTranspose2d layout; b: (COUT,)."""
    N, cin, H, W = x.shape
    assert cin == CIN
    Ho = (H - 1) * STRIDE + KH
    Wo = (W - 1) * STRIDE + KW
    Hph, Wph = H + 1, W + 1          # per-phase extent
    Wp = W + 3                       # padded row stride (1 left, 2 right)
    pin = (H + 3) * Wp               # flat padded input length
    pout = Hph * Wp                  # flat per-phase output length

    # glue: zero-pad (1 top/left, 2 bottom/right) and flatten spatial into lanes
    xp = jnp.pad(x.astype(jnp.float32),
                 ((0, 0), (0, 0), (1, 2), (1, 2))).reshape(N, CIN, pin)
    wT = jnp.transpose(w.astype(jnp.float32), (1, 0, 2, 3)).reshape(COUT, CIN * KH * KW)
    b2 = (b.astype(jnp.float32) + 2.0).reshape(COUT, 1)     # fold "+ 2" into bias

    flops = 2 * N * COUT * CIN * KH * KW * Hph * Wph
    bytes_accessed = 4 * (xp.size + wT.size + b2.size + N * 4 * COUT * pout)

    out_ph = pl.pallas_call(
        _make_kernel(Wp, pout),
        out_shape=jax.ShapeDtypeStruct((N, 4, COUT, pout), jnp.float32),
        grid=(N,),
        in_specs=[
            pl.BlockSpec((1, CIN, pin), lambda n: (n, 0, 0)),
            pl.BlockSpec((COUT, CIN * KH * KW), lambda n: (0, 0)),
            pl.BlockSpec((COUT, 1), lambda n: (0, 0)),
        ],
        out_specs=pl.BlockSpec((1, 4, COUT, pout), lambda n: (n, 0, 0, 0)),
        compiler_params=pltpu.CompilerParams(dimension_semantics=("parallel",)),
        cost_estimate=pl.CostEstimate(flops=flops, transcendentals=0,
                                      bytes_accessed=bytes_accessed),
    )(xp, wT, b2)

    # glue: one crop + transpose + reshape interleaves the 4 parity phases.
    # out_ph[n, 2*ph+pw, co, a*Wp + b]  ->  full[n, co, 2a+ph, 2b+pw]
    ph = out_ph.reshape(N, 2, 2, COUT, Hph, Wp)[..., :Wph]        # (N,2,2,C,Hph,Wph)
    full = ph.transpose(0, 3, 4, 1, 5, 2).reshape(N, COUT, 2 * Hph, 2 * Wph)
    return full[:, :, :Ho, :Wo]


def ref_conv_transpose_add2(x, w, b):
    """Direct (definition-level) reference for ConvTranspose2d + 2, pure JAX."""
    N, Cin, H, W = x.shape
    _, Cout, _, _ = w.shape
    Ho = (H - 1) * STRIDE + KH
    Wo = (W - 1) * STRIDE + KW
    out = jnp.zeros((N, Cout, Ho, Wo), jnp.float32)
    for kh in range(KH):
        for kw in range(KW):
            contrib = jnp.einsum("nchw,co->nohw", x, w[:, :, kh, kw])
            out = out.at[:, :,
                         kh:kh + (H - 1) * STRIDE + 1:STRIDE,
                         kw:kw + (W - 1) * STRIDE + 1:STRIDE].add(contrib)
    return out + b[None, :, None, None] + 2.0


if __name__ == "__main__":
    key = jax.random.PRNGKey(0)
    kx, kw, kb = jax.random.split(key, 3)

    # small shapes consistent with the module: batch=2, in_channels=3, spatial=16
    x = jax.random.normal(kx, (2, CIN, 16, 16), dtype=jnp.float32)

    # deterministic parameter init (ConvTranspose2d weight: (Cin, Cout, kH, kW))
    fan = CIN * KH * KW
    bound = 1.0 / (fan ** 0.5)
    w = jax.random.uniform(kw, (CIN, COUT, KH, KW), jnp.float32, -bound, bound)
    b = jax.random.uniform(kb, (COUT,), jnp.float32, -bound, bound)

    out = conv_transpose_add2(x, w, b)
    out = jax.block_until_ready(out)

    ref = ref_conv_transpose_add2(x, w, b)
    assert out.shape == (2, COUT, 33, 33), out.shape
    assert jnp.allclose(out, ref, atol=1e-4, rtol=1e-4), (
        float(jnp.max(jnp.abs(out - ref))))

    print("KERNEL_OK")
</pallas_src>

<mosaic_0001>
module attributes {stable_mosaic.version = 11 : i64} {
  func.func @kernel(%arg0: i32, %arg1: memref<1x3x361xf32, #tpu.memory_space<vmem>>, %arg2: memref<7x27xf32, #tpu.memory_space<vmem>>, %arg3: memref<7x1xf32, #tpu.memory_space<vmem>>, %arg4: memref<1x4x7x323xf32, #tpu.memory_space<vmem>>) attributes {dimension_semantics = [#tpu.dimension_semantics<parallel>], iteration_bounds = array<i64: 2>, scalar_prefetch = 0 : i64, scratch_operands = 0 : i64, tpu.core_type = #tpu.core_type<tc>, window_params = [{transform_indices = @transform_0, window_bounds = array<i64: 1, 3, 361>}, {pipeline_mode = #tpu.pipeline_mode<synchronous>, transform_indices = @transform_1, window_bounds = array<i64: 7, 27>}, {pipeline_mode = #tpu.pipeline_mode<synchronous>, transform_indices = @transform_2, window_bounds = array<i64: 7, 1>}, {transform_indices = @transform_3, window_bounds = array<i64: 1, 4, 7, 323>}]} {
    %c0 = arith.constant 0 : index
    %c0_0 = arith.constant 0 : index
    %c0_1 = arith.constant 0 : index
    %0 = vector.load %arg1[%c0, %c0_0, %c0_1] : memref<1x3x361xf32, #tpu.memory_space<vmem>>, vector<1x3x361xf32>
    %1 = vector.shape_cast %0 : vector<1x3x361xf32> to vector<3x361xf32>
    %c0_2 = arith.constant 0 : index
    %c0_3 = arith.constant 0 : index
    %2 = vector.load %arg2[%c0_2, %c0_3] : memref<7x27xf32, #tpu.memory_space<vmem>>, vector<7x27xf32>
    %c0_4 = arith.constant 0 : index
    %c0_5 = arith.constant 0 : index
    %3 = vector.load %arg3[%c0_4, %c0_5] : memref<7x1xf32, #tpu.memory_space<vmem>>, vector<7x1xf32>
    %4 = vector.shape_cast %3 : vector<7x1xf32> to vector<7x1xf32>
    %5 = vector.broadcast %4 : vector<7x1xf32> to vector<7x323xf32>
    %6 = vector.extract_strided_slice %1 {offsets = [0, 0], sizes = [1, 323], strides = [1, 1]} : vector<3x361xf32> to vector<1x323xf32>
    %7 = vector.extract_strided_slice %1 {offsets = [0, 1], sizes = [1, 323], strides = [1, 1]} : vector<3x361xf32> to vector<1x323xf32>
    %8 = vector.extract_strided_slice %1 {offsets = [0, 19], sizes = [1, 323], strides = [1, 1]} : vector<3x361xf32> to vector<1x323xf32>
    %9 = vector.extract_strided_slice %1 {offsets = [0, 20], sizes = [1, 323], strides = [1, 1]} : vector<3x361xf32> to vector<1x323xf32>
    %10 = vector.extract_strided_slice %1 {offsets = [1, 0], sizes = [1, 323], strides = [1, 1]} : vector<3x361xf32> to vector<1x323xf32>
    %11 = vector.extract_strided_slice %1 {offsets = [1, 1], sizes = [1, 323], strides = [1, 1]} : vector<3x361xf32> to vector<1x323xf32>
    %12 = vector.extract_strided_slice %1 {offsets = [1, 19], sizes = [1, 323], strides = [1, 1]} : vector<3x361xf32> to vector<1x323xf32>
    %13 = vector.extract_strided_slice %1 {offsets = [1, 20], sizes = [1, 323], strides = [1, 1]} : vector<3x361xf32> to vector<1x323xf32>
    %14 = vector.extract_strided_slice %1 {offsets = [2, 0], sizes = [1, 323], strides = [1, 1]} : vector<3x361xf32> to vector<1x323xf32>
    %15 = vector.extract_strided_slice %1 {offsets = [2, 1], sizes = [1, 323], strides = [1, 1]} : vector<3x361xf32> to vector<1x323xf32>
    %16 = vector.extract_strided_slice %1 {offsets = [2, 19], sizes = [1, 323], strides = [1, 1]} : vector<3x361xf32> to vector<1x323xf32>
    %17 = vector.extract_strided_slice %1 {offsets = [2, 20], sizes = [1, 323], strides = [1, 1]} : vector<3x361xf32> to vector<1x323xf32>
    %18 = vector.extract_strided_slice %2 {offsets = [0, 0], sizes = [7, 1], strides = [1, 1]} : vector<7x27xf32> to vector<7x1xf32>
    %19 = vector.broadcast %18 : vector<7x1xf32> to vector<7x323xf32>
    %20 = vector.broadcast %9 : vector<1x323xf32> to vector<7x323xf32>
    %21 = arith.mulf %19, %20 : vector<7x323xf32>
    %22 = arith.addf %5, %21 : vector<7x323xf32>
    %23 = vector.extract_strided_slice %2 {offsets = [0, 9], sizes = [7, 1], strides = [1, 1]} : vector<7x27xf32> to vector<7x1xf32>
    %24 = vector.broadcast %23 : vector<7x1xf32> to vector<7x323xf32>
    %25 = vector.broadcast %13 : vector<1x323xf32> to vector<7x323xf32>
    %26 = arith.mulf %24, %25 : vector<7x323xf32>
    %27 = arith.addf %22, %26 : vector<7x323xf32>
    %28 = vector.extract_strided_slice %2 {offsets = [0, 18], sizes = [7, 1], strides = [1, 1]} : vector<7x27xf32> to vector<7x1xf32>
    %29 = vector.broadcast %28 : vector<7x1xf32> to vector<7x323xf32>
    %30 = vector.broadcast %17 : vector<1x323xf32> to vector<7x323xf32>
    %31 = arith.mulf %29, %30 : vector<7x323xf32>
    %32 = arith.addf %27, %31 : vector<7x323xf32>
    %33 = vector.extract_strided_slice %2 {offsets = [0, 2], sizes = [7, 1], strides = [1, 1]} : vector<7x27xf32> to vector<7x1xf32>
    %34 = vector.broadcast %33 : vector<7x1xf32> to vector<7x323xf32>
    %35 = vector.broadcast %8 : vector<1x323xf32> to vector<7x323xf32>
    %36 = arith.mulf %34, %35 : vector<7x323xf32>
    %37 = arith.addf %32, %36 : vector<7x323xf32>
    %38 = vector.extract_strided_slice %2 {offsets = [0, 11], sizes = [7, 1], strides = [1, 1]} : vector<7x27xf32> to vector<7x1xf32>
    %39 = vector.broadcast %38 : vector<7x1xf32> to vector<7x323xf32>
    %40 = vector.broadcast %12 : vector<1x323xf32> to vector<7x323xf32>
    %41 = arith.mulf %39, %40 : vector<7x323xf32>
    %42 = arith.addf %37, %41 : vector<7x323xf32>
    %43 = vector.extract_strided_slice %2 {offsets = [0, 20], sizes = [7, 1], strides = [1, 1]} : vector<7x27xf32> to vector<7x1xf32>
    %44 = vector.broadcast %43 : vector<7x1xf32> to vector<7x323xf32>
    %45 = vector.broadcast %16 : vector<1x323xf32> to vector<7x323xf32>
    %46 = arith.mulf %44, %45 : vector<7x323xf32>
    %47 = arith.addf %42, %46 : vector<7x323xf32>
    %48 = vector.extract_strided_slice %2 {offsets = [0, 6], sizes = [7, 1], strides = [1, 1]} : vector<7x27xf32> to vector<7x1xf32>
    %49 = vector.broadcast %48 : vector<7x1xf32> to vector<7x323xf32>
    %50 = vector.broadcast %7 : vector<1x323xf32> to vector<7x323xf32>
    %51 = arith.mulf %49, %50 : vector<7x323xf32>
    %52 = arith.addf %47, %51 : vector<7x323xf32>
    %53 = vector.extract_strided_slice %2 {offsets = [0, 15], sizes = [7, 1], strides = [1, 1]} : vector<7x27xf32> to vector<7x1xf32>
    %54 = vector.broadcast %53 : vector<7x1xf32> to vector<7x323xf32>
    %55 = vector.broadcast %11 : vector<1x323xf32> to vector<7x323xf32>
    %56 = arith.mulf %54, %55 : vector<7x323xf32>
    %57 = arith.addf %52, %56 : vector<7x323xf32>
    %58 = vector.extract_strided_slice %2 {offsets = [0, 24], sizes = [7, 1], strides = [1, 1]} : vector<7x27xf32> to vector<7x1xf32>
    %59 = vector.broadcast %58 : vector<7x1xf32> to vector<7x323xf32>
    %60 = vector.broadcast %15 : vector<1x323xf32> to vector<7x323xf32>
    %61 = arith.mulf %59, %60 : vector<7x323xf32>
    %62 = arith.addf %57, %61 : vector<7x323xf32>
    %63 = vector.extract_strided_slice %2 {offsets = [0, 8], sizes = [7, 1], strides = [1, 1]} : vector<7x27xf32> to vector<7x1xf32>
    %64 = vector.broadcast %63 : vector<7x1xf32> to vector<7x323xf32>
    %65 = vector.broadcast %6 : vector<1x323xf32> to vector<7x323xf32>
    %66 = arith.mulf %64, %65 : vector<7x323xf32>
    %67 = arith.addf %62, %66 : vector<7x323xf32>
    %68 = vector.extract_strided_slice %2 {offsets = [0, 17], sizes = [7, 1], strides = [1, 1]} : vector<7x27xf32> to vector<7x1xf32>
    %69 = vector.broadcast %68 : vector<7x1xf32> to vector<7x323xf32>
    %70 = vector.broadcast %10 : vector<1x323xf32> to vector<7x323xf32>
    %71 = arith.mulf %69, %70 : vector<7x323xf32>
    %72 = arith.addf %67, %71 : vector<7x323xf32>
    %73 = vector.extract_strided_slice %2 {offsets = [0, 26], sizes = [7, 1], strides = [1, 1]} : vector<7x27xf32> to vector<7x1xf32>
    %74 = vector.broadcast %73 : vector<7x1xf32> to vector<7x323xf32>
    %75 = vector.broadcast %14 : vector<1x323xf32> to vector<7x323xf32>
    %76 = arith.mulf %74, %75 : vector<7x323xf32>
    %77 = arith.addf %72, %76 : vector<7x323xf32>
    %c0_6 = arith.constant 0 : index
    %c0_7 = arith.constant 0 : index
    %c0_8 = arith.constant 0 : index
    %c0_9 = arith.constant 0 : index
    %78 = vector.load %arg4[%c0_6, %c0_7, %c0_8, %c0_9] : memref<1x4x7x323xf32, #tpu.memory_space<vmem>>, vector<1x1x7x323xf32>
    %79 = vector.shape_cast %78 : vector<1x1x7x323xf32> to vector<7x323xf32>
    %80 = vector.shape_cast %77 : vector<7x323xf32> to vector<1x1x7x323xf32>
    tpu.vector_store %arg4[%c0_6, %c0_7, %c0_8, %c0_9], %80 {strides = array<i32>} : memref<1x4x7x323xf32, #tpu.memory_space<vmem>>, vector<1x1x7x323xf32>,
    %81 = vector.extract_strided_slice %2 {offsets = [0, 1], sizes = [7, 1], strides = [1, 1]} : vector<7x27xf32> to vector<7x1xf32>
    %82 = vector.broadcast %81 : vector<7x1xf32> to vector<7x323xf32>
    %83 = vector.broadcast %9 : vector<1x323xf32> to vector<7x323xf32>
    %84 = arith.mulf %82, %83 : vector<7x323xf32>
    %85 = arith.addf %5, %84 : vector<7x323xf32>
    %86 = vector.extract_strided_slice %2 {offsets = [0, 10], sizes = [7, 1], strides = [1, 1]} : vector<7x27xf32> to vector<7x1xf32>
    %87 = vector.broadcast %86 : vector<7x1xf32> to vector<7x323xf32>
    %88 = vector.broadcast %13 : vector<1x323xf32> to vector<7x323xf32>
    %89 = arith.mulf %87, %88 : vector<7x323xf32>
    %90 = arith.addf %85, %89 : vector<7x323xf32>
    %91 = vector.extract_strided_slice %2 {offsets = [0, 19], sizes = [7, 1], strides = [1, 1]} : vector<7x27xf32> to vector<7x1xf32>
    %92 = vector.broadcast %91 : vector<7x1xf32> to vector<7x323xf32>
    %93 = vector.broadcast %17 : vector<1x323xf32> to vector<7x323xf32>
    %94 = arith.mulf %92, %93 : vector<7x323xf32>
    %95 = arith.addf %90, %94 : vector<7x323xf32>
    %96 = vector.extract_strided_slice %2 {offsets = [0, 7], sizes = [7, 1], strides = [1, 1]} : vector<7x27xf32> to vector<7x1xf32>
    %97 = vector.broadcast %96 : vector<7x1xf32> to vector<7x323xf32>
    %98 = vector.broadcast %7 : vector<1x323xf32> to vector<7x323xf32>
    %99 = arith.mulf %97, %98 : vector<7x323xf32>
    %100 = arith.addf %95, %99 : vector<7x323xf32>
    %101 = vector.extract_strided_slice %2 {offsets = [0, 16], sizes = [7, 1], strides = [1, 1]} : vector<7x27xf32> to vector<7x1xf32>
    %102 = vector.broadcast %101 : vector<7x1xf32> to vector<7x323xf32>
    %103 = vector.broadcast %11 : vector<1x323xf32> to vector<7x323xf32>
    %104 = arith.mulf %102, %103 : vector<7x323xf32>
    %105 = arith.addf %100, %104 : vector<7x323xf32>
    %106 = vector.extract_strided_slice %2 {offsets = [0, 25], sizes = [7, 1], strides = [1, 1]} : vector<7x27xf32> to vector<7x1xf32>
    %107 = vector.broadcast %106 : vector<7x1xf32> to vector<7x323xf32>
    %108 = vector.broadcast %15 : vector<1x323xf32> to vector<7x323xf32>
    %109 = arith.mulf %107, %108 : vector<7x323xf32>
    %110 = arith.addf %105, %109 : vector<7x323xf32>
    %c0_10 = arith.constant 0 : index
    %c1 = arith.constant 1 : index
    %c0_11 = arith.constant 0 : index
    %c0_12 = arith.constant 0 : index
    %111 = vector.load %arg4[%c0_10, %c1, %c0_11, %c0_12] : memref<1x4x7x323xf32, #tpu.memory_space<vmem>>, vector<1x1x7x323xf32>
    %112 = vector.shape_cast %111 : vector<1x1x7x323xf32> to vector<7x323xf32>
    %113 = vector.shape_cast %110 : vector<7x323xf32> to vector<1x1x7x323xf32>
    tpu.vector_store %arg4[%c0_10, %c1, %c0_11, %c0_12], %113 {strides = array<i32>} : memref<1x4x7x323xf32, #tpu.memory_space<vmem>>, vector<1x1x7x323xf32>,
    %114 = vector.extract_strided_slice %2 {offsets = [0, 3], sizes = [7, 1], strides = [1, 1]} : vector<7x27xf32> to vector<7x1xf32>
    %115 = vector.broadcast %114 : vector<7x1xf32> to vector<7x323xf32>
    %116 = vector.broadcast %9 : vector<1x323xf32> to vector<7x323xf32>
    %117 = arith.mulf %115, %116 : vector<7x323xf32>
    %118 = arith.addf %5, %117 : vector<7x323xf32>
    %119 = vector.extract_strided_slice %2 {offsets = [0, 12], sizes = [7, 1], strides = [1, 1]} : vector<7x27xf32> to vector<7x1xf32>
    %120 = vector.broadcast %119 : vector<7x1xf32> to vector<7x323xf32>
    %121 = vector.broadcast %13 : vector<1x323xf32> to vector<7x323xf32>
    %122 = arith.mulf %120, %121 : vector<7x323xf32>
    %123 = arith.addf %118, %122 : vector<7x323xf32>
    %124 = vector.extract_strided_slice %2 {offsets = [0, 21], sizes = [7, 1], strides = [1, 1]} : vector<7x27xf32> to vector<7x1xf32>
    %125 = vector.broadcast %124 : vector<7x1xf32> to vector<7x323xf32>
    %126 = vector.broadcast %17 : vector<1x323xf32> to vector<7x323xf32>
    %127 = arith.mulf %125, %126 : vector<7x323xf32>
    %128 = arith.addf %123, %127 : vector<7x323xf32>
    %129 = vector.extract_strided_slice %2 {offsets = [0, 5], sizes = [7, 1], strides = [1, 1]} : vector<7x27xf32> to vector<7x1xf32>
    %130 = vector.broadcast %129 : vector<7x1xf32> to vector<7x323xf32>
    %131 = vector.broadcast %8 : vector<1x323xf32> to vector<7x323xf32>
    %132 = arith.mulf %130, %131 : vector<7x323xf32>
    %133 = arith.addf %128, %132 : vector<7x323xf32>
    %134 = vector.extract_strided_slice %2 {offsets = [0, 14], sizes = [7, 1], strides = [1, 1]} : vector<7x27xf32> to vector<7x1xf32>
    %135 = vector.broadcast %134 : vector<7x1xf32> to vector<7x323xf32>
    %136 = vector.broadcast %12 : vector<1x323xf32> to vector<7x323xf32>
    %137 = arith.mulf %135, %136 : vector<7x323xf32>
    %138 = arith.addf %133, %137 : vector<7x323xf32>
    %139 = vector.extract_strided_slice %2 {offsets = [0, 23], sizes = [7, 1], strides = [1, 1]} : vector<7x27xf32> to vector<7x1xf32>
    %140 = vector.broadcast %139 : vector<7x1xf32> to vector<7x323xf32>
    %141 = vector.broadcast %16 : vector<1x323xf32> to vector<7x323xf32>
    %142 = arith.mulf %140, %141 : vector<7x323xf32>
    %143 = arith.addf %138, %142 : vector<7x323xf32>
    %c0_13 = arith.constant 0 : index
    %c2 = arith.constant 2 : index
    %c0_14 = arith.constant 0 : index
    %c0_15 = arith.constant 0 : index
    %144 = vector.load %arg4[%c0_13, %c2, %c0_14, %c0_15] : memref<1x4x7x323xf32, #tpu.memory_space<vmem>>, vector<1x1x7x323xf32>
    %145 = vector.shape_cast %144 : vector<1x1x7x323xf32> to vector<7x323xf32>
    %146 = vector.shape_cast %143 : vector<7x323xf32> to vector<1x1x7x323xf32>
    tpu.vector_store %arg4[%c0_13, %c2, %c0_14, %c0_15], %146 {strides = array<i32>} : memref<1x4x7x323xf32, #tpu.memory_space<vmem>>, vector<1x1x7x323xf32>,
    %147 = vector.extract_strided_slice %2 {offsets = [0, 4], sizes = [7, 1], strides = [1, 1]} : vector<7x27xf32> to vector<7x1xf32>
    %148 = vector.broadcast %147 : vector<7x1xf32> to vector<7x323xf32>
    %149 = vector.broadcast %9 : vector<1x323xf32> to vector<7x323xf32>
    %150 = arith.mulf %148, %149 : vector<7x323xf32>
    %151 = arith.addf %5, %150 : vector<7x323xf32>
    %152 = vector.extract_strided_slice %2 {offsets = [0, 13], sizes = [7, 1], strides = [1, 1]} : vector<7x27xf32> to vector<7x1xf32>
    %153 = vector.broadcast %152 : vector<7x1xf32> to vector<7x323xf32>
    %154 = vector.broadcast %13 : vector<1x323xf32> to vector<7x323xf32>
    %155 = arith.mulf %153, %154 : vector<7x323xf32>
    %156 = arith.addf %151, %155 : vector<7x323xf32>
    %157 = vector.extract_strided_slice %2 {offsets = [0, 22], sizes = [7, 1], strides = [1, 1]} : vector<7x27xf32> to vector<7x1xf32>
    %158 = vector.broadcast %157 : vector<7x1xf32> to vector<7x323xf32>
    %159 = vector.broadcast %17 : vector<1x323xf32> to vector<7x323xf32>
    %160 = arith.mulf %158, %159 : vector<7x323xf32>
    %161 = arith.addf %156, %160 : vector<7x323xf32>
    %c0_16 = arith.constant 0 : index
    %c3 = arith.constant 3 : index
    %c0_17 = arith.constant 0 : index
    %c0_18 = arith.constant 0 : index
    %162 = vector.load %arg4[%c0_16, %c3, %c0_17, %c0_18] : memref<1x4x7x323xf32, #tpu.memory_space<vmem>>, vector<1x1x7x323xf32>
    %163 = vector.shape_cast %162 : vector<1x1x7x323xf32> to vector<7x323xf32>
    %164 = vector.shape_cast %161 : vector<7x323xf32> to vector<1x1x7x323xf32>
    tpu.vector_store %arg4[%c0_16, %c3, %c0_17, %c0_18], %164 {strides = array<i32>} : memref<1x4x7x323xf32, #tpu.memory_space<vmem>>, vector<1x1x7x323xf32>,
    return
  }
  func.func @transform_0(%arg0: i32) -> (i32, i32, i32) {
    %c0_i32 = arith.constant 0 : i32
    %c0_i32_0 = arith.constant 0 : i32
    %c0_i32_1 = arith.constant 0 : i32
    return %arg0, %c0_i32, %c0_i32_0 : i32, i32, i32
  }
  func.func @transform_1(%arg0: i32) -> (i32, i32) {
    %c0_i32 = arith.constant 0 : i32
    %c0_i32_0 = arith.constant 0 : i32
    %c0_i32_1 = arith.constant 0 : i32
    return %c0_i32, %c0_i32_0 : i32, i32
  }
  func.func @transform_2(%arg0: i32) -> (i32, i32) {
    %c0_i32 = arith.constant 0 : i32
    %c0_i32_0 = arith.constant 0 : i32
    %c0_i32_1 = arith.constant 0 : i32
    return %c0_i32, %c0_i32_0 : i32, i32
  }
  func.func @transform_3(%arg0: i32) -> (i32, i32, i32, i32) {
    %c0_i32 = arith.constant 0 : i32
    %c0_i32_0 = arith.constant 0 : i32
    %c0_i32_1 = arith.constant 0 : i32
    %c0_i32_2 = arith.constant 0 : i32
    return %arg0, %c0_i32, %c0_i32_0, %c0_i32_1 : i32, i32, i32, i32
  }
}

</mosaic_0001>

<llo_original>
// kernel: conv_transpose_add2.1
$region0: #{conv_transpose_add2.1}
  #allocation0 [shape = 'u32[]', space=smem, size = 0x4, offset = 0x4, fixed_abs, tag = 'smem constant byte address 0x4 - core index']
  #allocation1 [shape = 'u32[144,128]{1,0:T(1,128)}', space=vmem, size = 0x12000, scoped, tag = 'internal scratch']
  %s0 = inlined_call_operand.vmem [shape: f32[2,3,361], index: 0, kind: input, shape index: {}]
  %s1 = inlined_call_operand.vmem [shape: f32[7,27], index: 1, kind: input, shape index: {}]
  %s2 = inlined_call_operand.vmem [shape: f32[7,1], index: 2, kind: input, shape index: {}]
  %s3 = inlined_call_operand.vmem [shape: f32[2,4,7,323], index: 3, kind: output, shape index: {}]
  %s4 = sld [smem:[#allocation0]]
  $region45: #{conv_transpose_add2.1} parent=0
    _
  %s6 = ssub.s32 1, %s4
  %s7 = scalar_select 0, %s6, %s4
  loop: start=0, step=1, limit=4
  $region2: #{conv_transpose_add2.1} parent=0 // loop_pre_header
    _
  $region3: #{conv_transpose_add2.1} parent=0 // loop_header
    %s9 = sphi 0, %s13
    %p10 = scmp.ge.s32.totalorder %s9, 4
    %s19 = sphi 0, %s21
    %s22 = sphi 0, %s19
    %s23 = sphi 0, %s22
    %s39 = sphi 0, %s23
    %s43 = sphi 0, %s43
    %s45 = sphi 0, %s43
    %s46 = sphi 0, %s45
    %s60 = sphi 0, %s46
    %s64 = sphi 0, %s64
    %s66 = sphi 0, %s64
    %s67 = sphi 0, %s66
    %s81 = sphi 0, %s67
    %s87 = sphi 0, %s89
    %s90 = sphi 0, %s87
    %s91 = sphi 0, %s90
    %s107 = sphi 0, %s91
  $region4: #{conv_transpose_add2.1} parent=0 // loop_header_branch
    %12 = sbr.rel (%p10) target = $region8
  $region5: #{conv_transpose_add2.1} parent=0 // loop_body
    %s14 = ssub.s32 %s9, 1
    %s15 = ssub.s32 %s9, 2
    %s16 = sadd.s32 %s9, 1
    %s17 = ssub.s32 %s9, %s16
    %p18 = scmp.eq.s32.totalorder %s17, 0
    %s20 = sadd.s32 %s19, 1
    %s21 = scalar_select %p18, %s19, %s20
    %p24 = pneg %p18
    %p25 = scmp.eq.s32.totalorder %s9, 1
    %p26 = por %p24, %p25
    %p27 = scmp.ne.s32.totalorder %s19, %s22
    %p28 = scmp.eq.s32.totalorder %s9, 0
    %p29 = por %p27, %p28
    %p30 = scmp.ne.s32.totalorder %s19, %s22
    %p31 = scmp.eq.s32.totalorder %s14, 1
    %p32 = por %p30, %p31
    %p33 = scmp.ne.s32.totalorder %s22, %s23
    %p34 = scmp.eq.s32.totalorder %s14, 0
    %p35 = por %p33, %p34
    %p36 = scmp.ne.s32.totalorder %s22, %s23
    %p37 = scmp.eq.s32.totalorder %s15, 1
    %p38 = por %p36, %p37
    %p40 = scmp.ne.s32.totalorder %s23, %s39
    %p41 = scmp.eq.s32.totalorder %s15, 0
    %p42 = por %p40, %p41
    %s44 = sadd.s32 %s43, 1
    %p47 = scmp.eq.s32.totalorder %s9, 1
    %p48 = scmp.ne.s32.totalorder %s43, %s45
    %p49 = scmp.eq.s32.totalorder %s9, 0
    %p50 = por %p48, %p49
    %p51 = scmp.ne.s32.totalorder %s43, %s45
    %p52 = scmp.eq.s32.totalorder %s14, 1
    %p53 = por %p51, %p52
    %p54 = scmp.ne.s32.totalorder %s45, %s46
    %p55 = scmp.eq.s32.totalorder %s14, 0
    %p56 = por %p54, %p55
    %p57 = scmp.ne.s32.totalorder %s45, %s46
    %p58 = scmp.eq.s32.totalorder %s15, 1
    %p59 = por %p57, %p58
    %p61 = scmp.ne.s32.totalorder %s46, %s60
    %p62 = scmp.eq.s32.totalorder %s15, 0
    %p63 = por %p61, %p62
    %s65 = sadd.s32 %s64, 1
    %p68 = scmp.eq.s32.totalorder %s9, 1
    %p69 = scmp.ne.s32.totalorder %s64, %s66
    %p70 = scmp.eq.s32.totalorder %s9, 0
    %p71 = por %p69, %p70
    %p72 = scmp.ne.s32.totalorder %s64, %s66
    %p73 = scmp.eq.s32.totalorder %s14, 1
    %p74 = por %p72, %p73
    %p75 = scmp.ne.s32.totalorder %s66, %s67
    %p76 = scmp.eq.s32.totalorder %s14, 0
    %p77 = por %p75, %p76
    %p78 = scmp.ne.s32.totalorder %s66, %s67
    %p79 = scmp.eq.s32.totalorder %s15, 1
    %p80 = por %p78, %p79
    %p82 = scmp.ne.s32.totalorder %s67, %s81
    %p83 = scmp.eq.s32.totalorder %s15, 0
    %p84 = por %p82, %p83
    %s85 = ssub.s32 %s9, %s16
    %p86 = scmp.eq.s32.totalorder %s85, 0
    %s88 = sadd.s32 %s87, 1
    %s89 = scalar_select %p86, %s87, %s88
    %p92 = pneg %p86
    %p93 = scmp.eq.s32.totalorder %s9, 1
    %p94 = por %p92, %p93
    %p95 = scmp.ne.s32.totalorder %s87, %s90
    %p96 = scmp.eq.s32.totalorder %s9, 0
    %p97 = por %p95, %p96
    %p98 = scmp.ne.s32.totalorder %s87, %s90
    %p99 = scmp.eq.s32.totalorder %s14, 1
    %p100 = por %p98, %p99
    %p101 = scmp.ne.s32.totalorder %s90, %s91
    %p102 = scmp.eq.s32.totalorder %s14, 0
    %p103 = por %p101, %p102
    %p104 = scmp.ne.s32.totalorder %s90, %s91
    %p105 = scmp.eq.s32.totalorder %s15, 1
    %p106 = por %p104, %p105
    %p108 = scmp.ne.s32.totalorder %s91, %s107
    %p109 = scmp.eq.s32.totalorder %s15, 0
    %p110 = por %p108, %p109
    %p111 = scmp.le.s32.totalorder 1, %s9
    %p112 = scmp.lt.s32.totalorder %s9, 3
    %p113 = pnand %p111, %p112
    %p114 = pneg %p113
    // Predicated region
    $region9: #{conv_transpose_add2.1} parent=5 // pred_check
      _
    $region10: #{conv_transpose_add2.1} parent=5 // pred_check_branch
      %116 = sbr.rel (%p113) target = $region12
    $region11: #{conv_transpose_add2.1} parent=5 // pred_region
      %s117 = ssub.s32 %s9, 1
      // Predicated region
      $region13: #{conv_transpose_add2.1} parent=11 // pred_check
        %p118 = pneg %p56
      $region14: #{conv_transpose_add2.1} parent=11 // pred_check_branch
        %120 = sbr.rel (%p118) target = $region16
      $region15: #{conv_transpose_add2.1} parent=11 // pred_region
        _
      $region16: #{conv_transpose_add2.1} parent=11 // pred_fallthru
        _
      // Predicated region
      $region17: #{conv_transpose_add2.1} parent=11 // pred_check
        %p121 = pneg %p77
      $region18: #{conv_transpose_add2.1} parent=11 // pred_check_branch
        %123 = sbr.rel (%p121) target = $region20
      $region19: #{conv_transpose_add2.1} parent=11 // pred_region
        _
      $region20: #{conv_transpose_add2.1} parent=11 // pred_fallthru
        _
    $region12: #{conv_transpose_add2.1} parent=5 // pred_fallthru
      _
    %p124 = scmp.lt.s32.totalorder %s9, 2
    // Predicated region
    $region21: #{conv_transpose_add2.1} parent=5 // pred_check
      %p125 = pneg %p124
    $region22: #{conv_transpose_add2.1} parent=5 // pred_check_branch
      %127 = sbr.rel (%p125) target = $region24
    $region23: #{conv_transpose_add2.1} parent=5 // pred_region
      // Predicated region
      $region25: #{conv_transpose_add2.1} parent=23 // pred_check
        %p128 = pneg %p29
      $region26: #{conv_transpose_add2.1} parent=23 // pred_check_branch
        %130 = sbr.rel (%p128) target = $region28
      $region27: #{conv_transpose_add2.1} parent=23 // pred_region
        %p131 = scmp.lt.s32.totalorder %s9, 1
        %s132 = scalar_select %p131, %s9, 1
        %s133 = smul.addr %s132, 3
        %s134 = smul.addr %s133, 4
        %s135 = scalar_lea.vmem %s0, %s134
      $region28: #{conv_transpose_add2.1} parent=23 // pred_fallthru
        _
    $region24: #{conv_transpose_add2.1} parent=5 // pred_fallthru
      _
    %p136 = scmp.le.s32.totalorder 1, %s9
    %p137 = scmp.lt.s32.totalorder %s9, 3
    %p138 = pnand %p136, %p137
    %p139 = pneg %p138
    // Predicated region
    $region29: #{conv_transpose_add2.1} parent=5 // pred_check
      _
    $region30: #{conv_transpose_add2.1} parent=5 // pred_check_branch
      %141 = sbr.rel (%p138) target = $region32
    $region31: #{conv_transpose_add2.1} parent=5 // pred_region
      %s142 = ssub.s32 %s9, 1
      %p143 = scmp.lt.s32.totalorder %s14, 1
      %s144 = scalar_select %p143, %s14, 1
      %s145 = smul.addr %s144, 3
      %s146 = smul.addr %s145, 4
      %s147 = scalar_lea.vmem %s0, %s146
      %p148 = pneg %p35
      %p149 = pneg %p32
      %p150 = pneg %p56
      %p151 = pneg %p53
      %p152 = pneg %p77
      %p153 = pneg %p74
      %p154 = pneg %p103
      %p155 = pneg %p100
      %p156 = scmp.lt.s32.totalorder %s14, 1
      %s157 = scalar_select %p156, %s14, 1
      %s158 = smul.addr %s157, 12
      %s159 = smul.addr %s158, 8
      %s160 = scalar_lea.vmem %s3, %s159
      %p161 = scmp.lt.s32.totalorder %s14, 1
      %s162 = scalar_select %p161, %s14, 1
      %s163 = smul.addr %s162, 3
      %s164 = smul.addr %s163, 4
      %s165 = scalar_lea.vmem %s0, %s164
      %p166 = scmp.lt.s32.totalorder %s14, 1
      %s167 = scalar_select %p166, %s14, 1
      %s168 = smul.addr %s167, 12
      %s169 = smul.addr %s168, 8
      %s170 = scalar_lea.vmem %s3, %s169
      %v171 = vld [vmem:[%s165] sm:$0x77]
      %v172 = vld [vmem:[%s165 + $0x8] sm:$0x7]
      %v173 = vld [vmem:[%s1] sm:$0x7f]
      %v174 = vld [vmem:[%s2] sm:$0x7f]
      %176 = vset.pattern.permute.xlu0 0
      %177 = vperm.xlu0 %176, %v174
      %v178 = vpop.permute.xlu0 %177
      %181 = vset.pattern.permute.xlu0 0
      %182 = vperm.xlu0 %181, %v173
      %v183 = vpop.permute.xlu0 %182
      %v187 = vlaneseq
      %v188 = vshrl.u32 %v187, 7
      %v189 = vsub.s32 0, %v188
      %v190 = vrot.slane %v171, %v189
      %v191 = vlaneseq
      %v192 = vshrl.u32 %v191, 7
      %v193 = vsub.s32 4, %v192
      %v194 = vrot.slane %v171, %v193
      %v195 = vlaneseq
      %v196 = vshrl.u32 %v195, 7
      %v197 = vsub.s32 0, %v196
      %v198 = vrot.slane %v172, %v197
      %v202 = vlaneseq
      %v203 = vshrl.u32 %v202, 7
      %v204 = vsub.s32 0, %v203
      %v205 = vrot.slane %v190, %v204
      %v206 = vlaneseq
      %v207 = vshrl.u32 %v206, 7
      %v208 = vsub.s32 0, %v207
      %v209 = vrot.slane %v194, %v208
      %v210 = vlaneseq
      %v211 = vshrl.u32 %v210, 7
      %v212 = vsub.s32 0, %v211
      %v213 = vrot.slane %v198, %v212
      %v214 = vmul.f32 %v183, %v205
      %v215 = vmul.f32 %v183, %v209
      %v216 = vmul.f32 %v183, %v213
      %v217 = vadd.f32 %v178, %v214
      %v218 = vadd.f32 %v178, %v215
      %v219 = vadd.f32 %v178, %v216
      %220 = vset.pattern.permute.xlu0 9
      %221 = vperm.xlu0 %220, %v173
      %v222 = vpop.permute.xlu0 %221
      %v224 = vlaneseq
      %v225 = vshrl.u32 %v224, 7
      %v226 = vsub.s32 1, %v225
      %v227 = vrot.slane %v171, %v226
      %v228 = vlaneseq
      %v229 = vshrl.u32 %v228, 7
      %v230 = vsub.s32 5, %v229
      %v231 = vrot.slane %v171, %v230
      %v232 = vlaneseq
      %v233 = vshrl.u32 %v232, 7
      %v234 = vsub.s32 1, %v233
      %v235 = vrot.slane %v172, %v234
      %v239 = vlaneseq
      %v240 = vshrl.u32 %v239, 7
      %v241 = vsub.s32 1, %v240
      %v242 = vrot.slane %v227, %v241
      %v243 = vlaneseq
      %v244 = vshrl.u32 %v243, 7
      %v245 = vsub.s32 1, %v244
      %v246 = vrot.slane %v231, %v245
      %v247 = vlaneseq
      %v248 = vshrl.u32 %v247, 7
      %v249 = vsub.s32 1, %v248
      %v250 = vrot.slane %v235, %v249
      %v251 = vmul.f32 %v222, %v242
      %v252 = vmul.f32 %v222, %v246
      %v253 = vmul.f32 %v222, %v250
      %v254 = vadd.f32 %v217, %v251
      %v255 = vadd.f32 %v218, %v252
      %v256 = vadd.f32 %v219, %v253
      %257 = vset.pattern.permute.xlu0 18
      %258 = vperm.xlu0 %257, %v173
      %v259 = vpop.permute.xlu0 %258
      %v261 = vlaneseq
      %v262 = vshrl.u32 %v261, 7
      %v263 = vsub.s32 2, %v262
      %v264 = vrot.slane %v171, %v263
      %v265 = vlaneseq
      %v266 = vshrl.u32 %v265, 7
      %v267 = vsub.s32 6, %v266
      %v268 = vrot.slane %v171, %v267
      %v269 = vlaneseq
      %v270 = vshrl.u32 %v269, 7
      %v271 = vsub.s32 2, %v270
      %v272 = vrot.slane %v172, %v271
      %v276 = vlaneseq
      %v277 = vshrl.u32 %v276, 7
      %v278 = vsub.s32 2, %v277
      %v279 = vrot.slane %v264, %v278
      %v280 = vlaneseq
      %v281 = vshrl.u32 %v280, 7
      %v282 = vsub.s32 2, %v281
      %v283 = vrot.slane %v268, %v282
      %v284 = vlaneseq
      %v285 = vshrl.u32 %v284, 7
      %v286 = vsub.s32 2, %v285
      %v287 = vrot.slane %v272, %v286
      %v288 = vmul.f32 %v259, %v279
      %v289 = vmul.f32 %v259, %v283
      %v290 = vmul.f32 %v259, %v287
      %v291 = vadd.f32 %v254, %v288
      %v292 = vadd.f32 %v255, %v289
      %v293 = vadd.f32 %v256, %v290
      %294 = vset.pattern.permute.xlu0 2
      %295 = vperm.xlu0 %294, %v173
      %v296 = vpop.permute.xlu0 %295
      %v298 = vmul.f32 %v296, %v205
      %v299 = vmul.f32 %v296, %v209
      %v300 = vmul.f32 %v296, %v213
      %304 = vrot.lane.b32.xlu0 %v298, 1
      %v305 = vpop.permute.xlu0 %304
      %306 = vrot.lane.b32.xlu0 %v299, 1
      %v307 = vpop.permute.xlu0 %306
      %308 = vrot.lane.b32.xlu0 %v300, 1
      %v309 = vpop.permute.xlu0 %308
      %vm310 = vcmask 7168
      %v311 = vsel %vm310, %v305, %v307
      %v312 = vsel %vm310, %v307, %v309
      %v316 = vadd.f32 %v291, %v305
      %v317 = vadd.f32 %v292, %v311
      %v318 = vadd.f32 %v293, %v312
      %319 = vset.pattern.permute.xlu0 11
      %320 = vperm.xlu0 %319, %v173
      %v321 = vpop.permute.xlu0 %320
      %v323 = vmul.f32 %v321, %v242
      %v324 = vmul.f32 %v321, %v246
      %v325 = vmul.f32 %v321, %v250
      %329 = vrot.lane.b32.xlu0 %v323, 1
      %v330 = vpop.permute.xlu0 %329
      %331 = vrot.lane.b32.xlu0 %v324, 1
      %v332 = vpop.permute.xlu0 %331
      %333 = vrot.lane.b32.xlu0 %v325, 1
      %v334 = vpop.permute.xlu0 %333
      %v335 = vsel %vm310, %v330, %v332
      %v336 = vsel %vm310, %v332, %v334
      %v340 = vadd.f32 %v316, %v330
      %v341 = vadd.f32 %v317, %v335
      %v342 = vadd.f32 %v318, %v336
      %343 = vset.pattern.permute.xlu0 20
      %344 = vperm.xlu0 %343, %v173
      %v345 = vpop.permute.xlu0 %344
      %v347 = vmul.f32 %v345, %v279
      %v348 = vmul.f32 %v345, %v283
      %v349 = vmul.f32 %v345, %v287
      %353 = vrot.lane.b32.xlu0 %v347, 1
      %v354 = vpop.permute.xlu0 %353
      %355 = vrot.lane.b32.xlu0 %v348, 1
      %v356 = vpop.permute.xlu0 %355
      %357 = vrot.lane.b32.xlu0 %v349, 1
      %v358 = vpop.permute.xlu0 %357
      %v359 = vsel %vm310, %v354, %v356
      %v360 = vsel %vm310, %v356, %v358
      %v364 = vadd.f32 %v340, %v354
      %v365 = vadd.f32 %v341, %v359
      %v366 = vadd.f32 %v342, %v360
      %367 = vset.pattern.permute.xlu0 6
      %368 = vperm.xlu0 %367, %v173
      %v369 = vpop.permute.xlu0 %368
      %v371 = vmul.f32 %v369, %v205
      %v372 = vmul.f32 %v369, %v209
      %v373 = vmul.f32 %v369, %v213
      %377 = vrot.lane.b32.xlu0 %v371, 19
      %v378 = vpop.permute.xlu0 %377
      %379 = vrot.lane.b32.xlu0 %v372, 19
      %v380 = vpop.permute.xlu0 %379
      %381 = vrot.lane.b32.xlu0 %v373, 19
      %v382 = vpop.permute.xlu0 %381
      %vm383 = vcmask 154624
      %v384 = vsel %vm383, %v378, %v380
      %v385 = vsel %vm383, %v380, %v382
      %v389 = vadd.f32 %v364, %v378
      %v390 = vadd.f32 %v365, %v384
      %v391 = vadd.f32 %v366, %v385
      %392 = vset.pattern.permute.xlu0 15
      %393 = vperm.xlu0 %392, %v173
      %v394 = vpop.permute.xlu0 %393
      %v396 = vmul.f32 %v394, %v242
      %v397 = vmul.f32 %v394, %v246
      %v398 = vmul.f32 %v394, %v250
      %402 = vrot.lane.b32.xlu0 %v396, 19
      %v403 = vpop.permute.xlu0 %402
      %404 = vrot.lane.b32.xlu0 %v397, 19
      %v405 = vpop.permute.xlu0 %404
      %406 = vrot.lane.b32.xlu0 %v398, 19
      %v407 = vpop.permute.xlu0 %406
      %v408 = vsel %vm383, %v403, %v405
      %v409 = vsel %vm383, %v405, %v407
      %v413 = vadd.f32 %v389, %v403
      %v414 = vadd.f32 %v390, %v408
      %v415 = vadd.f32 %v391, %v409
      %416 = vset.pattern.permute.xlu0 24
      %417 = vperm.xlu0 %416, %v173
      %v418 = vpop.permute.xlu0 %417
      %v420 = vmul.f32 %v418, %v279
      %v421 = vmul.f32 %v418, %v283
      %v422 = vmul.f32 %v418, %v287
      %426 = vrot.lane.b32.xlu0 %v420, 19
      %v427 = vpop.permute.xlu0 %426
      %428 = vrot.lane.b32.xlu0 %v421, 19
      %v429 = vpop.permute.xlu0 %428
      %430 = vrot.lane.b32.xlu0 %v422, 19
      %v431 = vpop.permute.xlu0 %430
      %v432 = vsel %vm383, %v427, %v429
      %v433 = vsel %vm383, %v429, %v431
      %v437 = vadd.f32 %v413, %v427
      %v438 = vadd.f32 %v414, %v432
      %v439 = vadd.f32 %v415, %v433
      %440 = vset.pattern.permute.xlu0 8
      %441 = vperm.xlu0 %440, %v173
      %v442 = vpop.permute.xlu0 %441
      %v444 = vmul.f32 %v442, %v205
      %v445 = vmul.f32 %v442, %v209
      %v446 = vmul.f32 %v442, %v213
      %450 = vrot.lane.b32.xlu0 %v444, 20
      %v451 = vpop.permute.xlu0 %450
      %452 = vrot.lane.b32.xlu0 %v445, 20
      %v453 = vpop.permute.xlu0 %452
      %454 = vrot.lane.b32.xlu0 %v446, 20
      %v455 = vpop.permute.xlu0 %454
      %vm456 = vcmask 162816
      %v457 = vsel %vm456, %v451, %v453
      %v458 = vsel %vm456, %v453, %v455
      %v462 = vadd.f32 %v437, %v451
      %v463 = vadd.f32 %v438, %v457
      %v464 = vadd.f32 %v439, %v458
      %465 = vset.pattern.permute.xlu0 17
      %466 = vperm.xlu0 %465, %v173
      %v467 = vpop.permute.xlu0 %466
      %v469 = vmul.f32 %v467, %v242
      %v470 = vmul.f32 %v467, %v246
      %v471 = vmul.f32 %v467, %v250
      %475 = vrot.lane.b32.xlu0 %v469, 20
      %v476 = vpop.permute.xlu0 %475
      %477 = vrot.lane.b32.xlu0 %v470, 20
      %v478 = vpop.permute.xlu0 %477
      %479 = vrot.lane.b32.xlu0 %v471, 20
      %v480 = vpop.permute.xlu0 %479
      %v481 = vsel %vm456, %v476, %v478
      %v482 = vsel %vm456, %v478, %v480
      %v486 = vadd.f32 %v462, %v476
      %v487 = vadd.f32 %v463, %v481
      %v488 = vadd.f32 %v464, %v482
      %489 = vset.pattern.permute.xlu0 26
      %490 = vperm.xlu0 %489, %v173
      %v491 = vpop.permute.xlu0 %490
      %v493 = vmul.f32 %v491, %v279
      %v494 = vmul.f32 %v491, %v283
      %v495 = vmul.f32 %v491, %v287
      %499 = vrot.lane.b32.xlu0 %v493, 20
      %v500 = vpop.permute.xlu0 %499
      %501 = vrot.lane.b32.xlu0 %v494, 20
      %v502 = vpop.permute.xlu0 %501
      %503 = vrot.lane.b32.xlu0 %v495, 20
      %v504 = vpop.permute.xlu0 %503
      %v505 = vsel %vm456, %v500, %v502
      %v506 = vsel %vm456, %v502, %v504
      %v510 = vadd.f32 %v486, %v500
      %v511 = vadd.f32 %v487, %v505
      %v512 = vadd.f32 %v488, %v506
      %516 = vrot.lane.b32.xlu0 %v510, 108
      %v517 = vpop.permute.xlu0 %516
      %518 = vrot.lane.b32.xlu0 %v511, 108
      %v519 = vpop.permute.xlu0 %518
      %520 = vrot.lane.b32.xlu0 %v512, 108
      %v521 = vpop.permute.xlu0 %520
      %vm522 = vcmask 883712
      %v523 = vsel %vm522, %v517, %v519
      %v524 = vsel %vm522, %v519, %v521
      %528 = vst [vmem:[%s170] sm:$0x7f] %v523
      %529 = vst [vmem:[%s170 + $0x8] sm:$0x7f] %v524
      %vm530 = vcmask 546816
      %531 = vst.msk [vmem:[%s170 + $0x10] sm:$0x7f] %vm530, %v521
      %532 = vset.pattern.permute.xlu0 1
      %533 = vperm.xlu0 %532, %v173
      %v534 = vpop.permute.xlu0 %533
      %v536 = vmul.f32 %v534, %v205
      %v537 = vmul.f32 %v534, %v209
      %v538 = vmul.f32 %v534, %v213
      %v539 = vadd.f32 %v178, %v536
      %v540 = vadd.f32 %v178, %v537
      %v541 = vadd.f32 %v178, %v538
      %542 = vset.pattern.permute.xlu0 10
      %543 = vperm.xlu0 %542, %v173
      %v544 = vpop.permute.xlu0 %543
      %v546 = vmul.f32 %v544, %v242
      %v547 = vmul.f32 %v544, %v246
      %v548 = vmul.f32 %v544, %v250
      %v549 = vadd.f32 %v539, %v546
      %v550 = vadd.f32 %v540, %v547
      %v551 = vadd.f32 %v541, %v548
      %552 = vset.pattern.permute.xlu0 19
      %553 = vperm.xlu0 %552, %v173
      %v554 = vpop.permute.xlu0 %553
      %v556 = vmul.f32 %v554, %v279
      %v557 = vmul.f32 %v554, %v283
      %v558 = vmul.f32 %v554, %v287
      %v559 = vadd.f32 %v549, %v556
      %v560 = vadd.f32 %v550, %v557
      %v561 = vadd.f32 %v551, %v558
      %562 = vset.pattern.permute.xlu0 7
      %563 = vperm.xlu0 %562, %v173
      %v564 = vpop.permute.xlu0 %563
      %v566 = vmul.f32 %v564, %v205
      %v567 = vmul.f32 %v564, %v209
      %v568 = vmul.f32 %v564, %v213
      %572 = vrot.lane.b32.xlu0 %v566, 19
      %v573 = vpop.permute.xlu0 %572
      %574 = vrot.lane.b32.xlu0 %v567, 19
      %v575 = vpop.permute.xlu0 %574
      %576 = vrot.lane.b32.xlu0 %v568, 19
      %v577 = vpop.permute.xlu0 %576
      %v578 = vsel %vm383, %v573, %v575
      %v579 = vsel %vm383, %v575, %v577
      %v583 = vadd.f32 %v559, %v573
      %v584 = vadd.f32 %v560, %v578
      %v585 = vadd.f32 %v561, %v579
      %586 = vset.pattern.permute.xlu0 16
      %587 = vperm.xlu0 %586, %v173
      %v588 = vpop.permute.xlu0 %587
      %v590 = vmul.f32 %v588, %v242
      %v591 = vmul.f32 %v588, %v246
      %v592 = vmul.f32 %v588, %v250
      %596 = vrot.lane.b32.xlu0 %v590, 19
      %v597 = vpop.permute.xlu0 %596
      %598 = vrot.lane.b32.xlu0 %v591, 19
      %v599 = vpop.permute.xlu0 %598
      %600 = vrot.lane.b32.xlu0 %v592, 19
      %v601 = vpop.permute.xlu0 %600
      %v602 = vsel %vm383, %v597, %v599
      %v603 = vsel %vm383, %v599, %v601
      %v607 = vadd.f32 %v583, %v597
      %v608 = vadd.f32 %v584, %v602
      %v609 = vadd.f32 %v585, %v603
      %610 = vset.pattern.permute.xlu0 25
      %611 = vperm.xlu0 %610, %v173
      %v612 = vpop.permute.xlu0 %611
      %v614 = vmul.f32 %v612, %v279
      %v615 = vmul.f32 %v612, %v283
      %v616 = vmul.f32 %v612, %v287
      %620 = vrot.lane.b32.xlu0 %v614, 19
      %v621 = vpop.permute.xlu0 %620
      %622 = vrot.lane.b32.xlu0 %v615, 19
      %v623 = vpop.permute.xlu0 %622
      %624 = vrot.lane.b32.xlu0 %v616, 19
      %v625 = vpop.permute.xlu0 %624
      %v626 = vsel %vm383, %v621, %v623
      %v627 = vsel %vm383, %v623, %v625
      %v631 = vadd.f32 %v607, %v621
      %v632 = vadd.f32 %v608, %v626
      %v633 = vadd.f32 %v609, %v627
      %637 = vrot.lane.b32.xlu0 %v631, 108
      %v638 = vpop.permute.xlu0 %637
      %639 = vrot.lane.b32.xlu0 %v632, 108
      %v640 = vpop.permute.xlu0 %639
      %641 = vrot.lane.b32.xlu0 %v633, 108
      %v642 = vpop.permute.xlu0 %641
      %v643 = vsel %vm522, %v638, %v640
      %v644 = vsel %vm522, %v640, %v642
      %s648 = scalar_lea.vmem %s170, 24
      %649 = vst [vmem:[%s648] sm:$0x7f] %v643
      %650 = vst [vmem:[%s648 + $0x8] sm:$0x7f] %v644
      %651 = vst.msk [vmem:[%s648 + $0x10] sm:$0x7f] %vm530, %v642
      %652 = vset.pattern.permute.xlu0 3
      %653 = vperm.xlu0 %652, %v173
      %v654 = vpop.permute.xlu0 %653
      %v656 = vmul.f32 %v654, %v205
      %v657 = vmul.f32 %v654, %v209
      %v658 = vmul.f32 %v654, %v213
      %v659 = vadd.f32 %v178, %v656
      %v660 = vadd.f32 %v178, %v657
      %v661 = vadd.f32 %v178, %v658
      %662 = vset.pattern.permute.xlu0 12
      %663 = vperm.xlu0 %662, %v173
      %v664 = vpop.permute.xlu0 %663
      %v666 = vmul.f32 %v664, %v242
      %v667 = vmul.f32 %v664, %v246
      %v668 = vmul.f32 %v664, %v250
      %v669 = vadd.f32 %v659, %v666
      %v670 = vadd.f32 %v660, %v667
      %v671 = vadd.f32 %v661, %v668
      %672 = vset.pattern.permute.xlu0 21
      %673 = vperm.xlu0 %672, %v173
      %v674 = vpop.permute.xlu0 %673
      %v676 = vmul.f32 %v674, %v279
      %v677 = vmul.f32 %v674, %v283
      %v678 = vmul.f32 %v674, %v287
      %v679 = vadd.f32 %v669, %v676
      %v680 = vadd.f32 %v670, %v677
      %v681 = vadd.f32 %v671, %v678
      %682 = vset.pattern.permute.xlu0 5
      %683 = vperm.xlu0 %682, %v173
      %v684 = vpop.permute.xlu0 %683
      %v686 = vmul.f32 %v684, %v205
      %v687 = vmul.f32 %v684, %v209
      %v688 = vmul.f32 %v684, %v213
      %692 = vrot.lane.b32.xlu0 %v686, 1
      %v693 = vpop.permute.xlu0 %692
      %694 = vrot.lane.b32.xlu0 %v687, 1
      %v695 = vpop.permute.xlu0 %694
      %696 = vrot.lane.b32.xlu0 %v688, 1
      %v697 = vpop.permute.xlu0 %696
      %v698 = vsel %vm310, %v693, %v695
      %v699 = vsel %vm310, %v695, %v697
      %v703 = vadd.f32 %v679, %v693
      %v704 = vadd.f32 %v680, %v698
      %v705 = vadd.f32 %v681, %v699
      %706 = vset.pattern.permute.xlu0 14
      %707 = vperm.xlu0 %706, %v173
      %v708 = vpop.permute.xlu0 %707
      %v710 = vmul.f32 %v708, %v242
      %v711 = vmul.f32 %v708, %v246
      %v712 = vmul.f32 %v708, %v250
      %716 = vrot.lane.b32.xlu0 %v710, 1
      %v717 = vpop.permute.xlu0 %716
      %718 = vrot.lane.b32.xlu0 %v711, 1
      %v719 = vpop.permute.xlu0 %718
      %720 = vrot.lane.b32.xlu0 %v712, 1
      %v721 = vpop.permute.xlu0 %720
      %v722 = vsel %vm310, %v717, %v719
      %v723 = vsel %vm310, %v719, %v721
      %v727 = vadd.f32 %v703, %v717
      %v728 = vadd.f32 %v704, %v722
      %v729 = vadd.f32 %v705, %v723
      %730 = vset.pattern.permute.xlu0 23
      %731 = vperm.xlu0 %730, %v173
      %v732 = vpop.permute.xlu0 %731
      %v734 = vmul.f32 %v732, %v279
      %v735 = vmul.f32 %v732, %v283
      %v736 = vmul.f32 %v732, %v287
      %740 = vrot.lane.b32.xlu0 %v734, 1
      %v741 = vpop.permute.xlu0 %740
      %742 = vrot.lane.b32.xlu0 %v735, 1
      %v743 = vpop.permute.xlu0 %742
      %744 = vrot.lane.b32.xlu0 %v736, 1
      %v745 = vpop.permute.xlu0 %744
      %v746 = vsel %vm310, %v741, %v743
      %v747 = vsel %vm310, %v743, %v745
      %v751 = vadd.f32 %v727, %v741
      %v752 = vadd.f32 %v728, %v746
      %v753 = vadd.f32 %v729, %v747
      %757 = vrot.lane.b32.xlu0 %v751, 108
      %v758 = vpop.permute.xlu0 %757
      %759 = vrot.lane.b32.xlu0 %v752, 108
      %v760 = vpop.permute.xlu0 %759
      %761 = vrot.lane.b32.xlu0 %v753, 108
      %v762 = vpop.permute.xlu0 %761
      %v763 = vsel %vm522, %v758, %v760
      %v764 = vsel %vm522, %v760, %v762
      %s768 = scalar_lea.vmem %s170, 48
      %769 = vst [vmem:[%s768] sm:$0x7f] %v763
      %770 = vst [vmem:[%s768 + $0x8] sm:$0x7f] %v764
      %771 = vst.msk [vmem:[%s768 + $0x10] sm:$0x7f] %vm530, %v762
      %772 = vset.pattern.permute.xlu0 4
      %773 = vperm.xlu0 %772, %v173
      %v774 = vpop.permute.xlu0 %773
      %v776 = vmul.f32 %v774, %v205
      %v777 = vmul.f32 %v774, %v209
      %v778 = vmul.f32 %v774, %v213
      %v779 = vadd.f32 %v178, %v776
      %v780 = vadd.f32 %v178, %v777
      %v781 = vadd.f32 %v178, %v778
      %782 = vset.pattern.permute.xlu0 13
      %783 = vperm.xlu0 %782, %v173
      %v784 = vpop.permute.xlu0 %783
      %v786 = vmul.f32 %v784, %v242
      %v787 = vmul.f32 %v784, %v246
      %v788 = vmul.f32 %v784, %v250
      %v789 = vadd.f32 %v779, %v786
      %v790 = vadd.f32 %v780, %v787
      %v791 = vadd.f32 %v781, %v788
      %792 = vset.pattern.permute.xlu0 22
      %793 = vperm.xlu0 %792, %v173
      %v794 = vpop.permute.xlu0 %793
      %v796 = vmul.f32 %v794, %v279
      %v797 = vmul.f32 %v794, %v283
      %v798 = vmul.f32 %v794, %v287
      %v799 = vadd.f32 %v789, %v796
      %v800 = vadd.f32 %v790, %v797
      %v801 = vadd.f32 %v791, %v798
      %805 = vrot.lane.b32.xlu0 %v799, 108
      %v806 = vpop.permute.xlu0 %805
      %807 = vrot.lane.b32.xlu0 %v800, 108
      %v808 = vpop.permute.xlu0 %807
      %809 = vrot.lane.b32.xlu0 %v801, 108
      %v810 = vpop.permute.xlu0 %809
      %v811 = vsel %vm522, %v806, %v808
      %v812 = vsel %vm522, %v808, %v810
      %s816 = scalar_lea.vmem %s170, 72
      %817 = vst [vmem:[%s816] sm:$0x7f] %v811
      %818 = vst [vmem:[%s816 + $0x8] sm:$0x7f] %v812
      %819 = vst.msk [vmem:[%s816 + $0x10] sm:$0x7f] %vm530, %v810
      %p820 = scmp.lt.s32.totalorder %s14, 1
      %s821 = scalar_select %p820, %s14, 1
      %s822 = smul.addr %s821, 12
      %s823 = smul.addr %s822, 8
      %s824 = scalar_lea.vmem %s3, %s823
      // Predicated region
      $region33: #{conv_transpose_add2.1} parent=31 // pred_check
        %p825 = pneg %p100
      $region34: #{conv_transpose_add2.1} parent=31 // pred_check_branch
        %827 = sbr.rel (%p825) target = $region36
      $region35: #{conv_transpose_add2.1} parent=31 // pred_region
        _
      $region36: #{conv_transpose_add2.1} parent=31 // pred_fallthru
        _
    $region32: #{conv_transpose_add2.1} parent=5 // pred_fallthru
      _
    %p828 = scmp.le.s32.totalorder 2, %s9
    // Predicated region
    $region37: #{conv_transpose_add2.1} parent=5 // pred_check
      %p829 = pneg %p828
    $region38: #{conv_transpose_add2.1} parent=5 // pred_check_branch
      %831 = sbr.rel (%p829) target = $region40
    $region39: #{conv_transpose_add2.1} parent=5 // pred_region
      %s832 = ssub.s32 %s9, 2
      // Predicated region
      $region41: #{conv_transpose_add2.1} parent=39 // pred_check
        %p833 = pneg %p106
      $region42: #{conv_transpose_add2.1} parent=39 // pred_check_branch
        %835 = sbr.rel (%p833) target = $region44
      $region43: #{conv_transpose_add2.1} parent=39 // pred_region
        %p836 = scmp.lt.s32.totalorder %s15, 1
        %s837 = scalar_select %p836, %s15, 1
        %s838 = smul.addr %s837, 12
        %s839 = smul.addr %s838, 8
        %s840 = scalar_lea.vmem %s3, %s839
      $region44: #{conv_transpose_add2.1} parent=39 // pred_fallthru
        _
    $region40: #{conv_transpose_add2.1} parent=5 // pred_fallthru
      _
  $region6: #{conv_transpose_add2.1} parent=0 // loop_footer
    %s13 = sadd.s32 1, %s9
  $region7: #{conv_transpose_add2.1} parent=0 // loop_footer_branch
    %8 = sbr.rel target = $region3
  $region8: #{conv_transpose_add2.1} parent=0 // loop_exit
    _

</llo_original>
